<compile_context>
chip_gen: v5e
topology: v5e:2x2
jax: 0.10.0
libtpu: 0.0.40
codegen_flags: <defaults>
</compile_context>

<pallas_src>
import functools

import jax
import jax.numpy as jnp
from jax.experimental import pallas as pl
from jax.experimental.pallas import tpu as pltpu


# --------------------------------- kernels ---------------------------------
def _l2norm_kernel_dense(x_ref, w_ref, out_ref, *, eps):
    # x_ref:   (1, C, S, 128)  dense spatial slab per channel
    # w_ref:   (C, 1, 1)       per-channel scale
    # out_ref: (1, C, S, 128)
    x = x_ref[0].astype(jnp.float32)                 # (C, S, 128)
    sumsq = jnp.sum(x * x, axis=0)                   # (S, 128) — VPU adds over dense slabs
    inv = 1.0 / (jnp.sqrt(sumsq) + eps)              # (S, 128)
    w = w_ref[...].astype(jnp.float32)               # (C, 1, 1)
    out_ref[0] = (x * inv[None, :, :] * w).astype(out_ref.dtype)


def _l2norm_kernel_flat(x_ref, w_ref, out_ref, *, eps):
    # Fallback layout: x_ref (1, C, HW); channels on sublanes, spatial on lanes.
    x = x_ref[0].astype(jnp.float32)                 # (C, HW)
    sumsq = jnp.sum(x * x, axis=0, keepdims=True)    # (1, HW) cross-sublane reduce
    inv = 1.0 / (jnp.sqrt(sumsq) + eps)              # (1, HW)
    w = w_ref[...].astype(jnp.float32)               # (C, 1)
    out_ref[0] = (x * inv * w).astype(out_ref.dtype)


# --------------------------------- wrapper ---------------------------------
def _choose_block_rows(s_total, c, itemsize, n_images):
    """Rows (each row = 128 lanes) per block, sized by a ~2 MiB byte budget.

    2 MiB/block -> 8 MiB of double-buffered in+out pipelining plus in-kernel
    f32 intermediates, well under the 16 MiB (v5e) / 32 MiB (v6e, v7x) default
    scoped-VMEM limits.
    """
    target_bytes = 2 * 1024 * 1024
    row_bytes = c * 128 * itemsize
    s = max(8, (target_bytes // row_bytes) // 8 * 8)
    if s >= s_total:
        s = s_total
    else:
        # shrink to a multiple of 8 that divides s_total so every block is a
        # full, unmasked lane/sublane-dense access
        while s > 8 and (s_total % s):
            s -= 8
        if s_total % s:
            s = s_total  # last resort: one full block along this axis
    # v7x megacore: prefer >= 4 total grid steps so both TensorCores get work
    while (n_images * (s_total // s) < 4 and s % 16 == 0
           and s_total % (s // 2) == 0):
        s //= 2
    return s


def l2norm_pallas(x_nchw, weight, eps=1e-10):
    N, C, H, W = x_nchw.shape
    assert weight.shape == (C,), (weight.shape, C)
    HW = H * W
    itemsize = jnp.dtype(x_nchw.dtype).itemsize

    if HW % 128 == 0:
        # Primary path: (N, C, S, 128) — dense tiles for any C.
        s_total = HW // 128
        s = _choose_block_rows(s_total, C, itemsize, N)
        x4 = x_nchw.reshape(N, C, s_total, 128)
        w3 = weight.reshape(C, 1, 1)
        out = pl.pallas_call(
            functools.partial(_l2norm_kernel_dense, eps=eps),
            out_shape=jax.ShapeDtypeStruct((N, C, s_total, 128), x_nchw.dtype),
            grid=(N, s_total // s),
            in_specs=[
                pl.BlockSpec((1, C, s, 128), lambda n, t: (n, 0, t, 0)),
                pl.BlockSpec((C, 1, 1), lambda n, t: (0, 0, 0)),
            ],
            out_specs=pl.BlockSpec((1, C, s, 128), lambda n, t: (n, 0, t, 0)),
            compiler_params=pltpu.CompilerParams(
                dimension_semantics=("parallel", "parallel")),
        )(x4, w3)
        return out.reshape(N, C, H, W)

    # Fallback: HW not a multiple of 128 — full spatial extent per block
    # (block == full dim is always layout-legal; edge stores may be masked).
    x3 = x_nchw.reshape(N, C, HW)
    w2 = weight.reshape(C, 1)
    out = pl.pallas_call(
        functools.partial(_l2norm_kernel_flat, eps=eps),
        out_shape=jax.ShapeDtypeStruct((N, C, HW), x_nchw.dtype),
        grid=(N,),
        in_specs=[
            pl.BlockSpec((1, C, HW), lambda n: (n, 0, 0)),
            pl.BlockSpec((C, 1), lambda n: (0, 0)),
        ],
        out_specs=pl.BlockSpec((1, C, HW), lambda n: (n, 0, 0)),
        compiler_params=pltpu.CompilerParams(
            dimension_semantics=("parallel",)),
    )(x3, w2)
    return out.reshape(N, C, H, W)


# --------------------- pure-JAX reference (for verification) ---------------------
def l2norm_ref(x, weight, eps=1e-10):
    norm = jnp.sqrt(jnp.sum(x * x, axis=1, keepdims=True)) + eps
    return weight.reshape(1, -1, 1, 1) * (x / norm)


if __name__ == "__main__":
    gamma = 20.0  # reset_parameters() fills weight with the constant `scale`
    key = jax.random.PRNGKey(0)

    # Primary path: HW divisible by 128 (batch=2, channels=4, spatial=16x16).
    N, C, H, W = 2, 4, 16, 16
    kx, kw = jax.random.split(key)
    x = jax.random.normal(kx, (N, C, H, W), jnp.float32)
    weight = jnp.full((C,), gamma, jnp.float32)

    out = jax.block_until_ready(l2norm_pallas(x, weight))
    ref = jax.block_until_ready(l2norm_ref(x, weight))
    assert out.shape == (N, C, H, W), out.shape
    assert jnp.allclose(out, ref, rtol=1e-5, atol=1e-5), float(jnp.max(jnp.abs(out - ref)))

    # Fallback path: HW not divisible by 128 (e.g. SSD-style odd spatial size).
    H2 = W2 = 10
    x2 = jax.random.normal(kw, (N, C, H2, W2), jnp.float32)
    out2 = jax.block_until_ready(l2norm_pallas(x2, weight))
    ref2 = jax.block_until_ready(l2norm_ref(x2, weight))
    assert out2.shape == (N, C, H2, W2), out2.shape
    assert jnp.allclose(out2, ref2, rtol=1e-5, atol=1e-5), float(jnp.max(jnp.abs(out2 - ref2)))

    print("KERNEL_OK")
</pallas_src>

<mosaic_0001>
module attributes {stable_mosaic.version = 11 : i64} {
  func.func @_l2norm_kernel_dense(%arg0: i32, %arg1: i32, %arg2: memref<1x4x2x128xf32, #tpu.memory_space<vmem>>, %arg3: memref<4x1x1xf32, #tpu.memory_space<vmem>>, %arg4: memref<1x4x2x128xf32, #tpu.memory_space<vmem>>) attributes {dimension_semantics = [#tpu.dimension_semantics<parallel>, #tpu.dimension_semantics<parallel>], iteration_bounds = array<i64: 2, 1>, scalar_prefetch = 0 : i64, scratch_operands = 0 : i64, tpu.core_type = #tpu.core_type<tc>, window_params = [{transform_indices = @transform_0, window_bounds = array<i64: 1, 4, 2, 128>}, {pipeline_mode = #tpu.pipeline_mode<synchronous>, transform_indices = @transform_1, window_bounds = array<i64: 4, 1, 1>}, {transform_indices = @transform_2, window_bounds = array<i64: 1, 4, 2, 128>}]} {
    %c0 = arith.constant 0 : index
    %c0_0 = arith.constant 0 : index
    %c0_1 = arith.constant 0 : index
    %c0_2 = arith.constant 0 : index
    %0 = vector.load %arg2[%c0, %c0_0, %c0_1, %c0_2] : memref<1x4x2x128xf32, #tpu.memory_space<vmem>>, vector<1x4x2x128xf32>
    %1 = vector.shape_cast %0 : vector<1x4x2x128xf32> to vector<4x2x128xf32>
    %2 = arith.mulf %1, %1 : vector<4x2x128xf32>
    %cst = arith.constant dense<0.000000e+00> : vector<2x128xf32>
    %3 = vector.multi_reduction <add>, %2, %cst [0] : vector<4x2x128xf32> to vector<2x128xf32>
    %4 = math.sqrt %3 : vector<2x128xf32>
    %cst_3 = arith.constant 1.000000e-10 : f32
    %5 = vector.broadcast %cst_3 : f32 to vector<2x128xf32>
    %6 = arith.addf %4, %5 : vector<2x128xf32>
    %cst_4 = arith.constant 1.000000e+00 : f32
    %7 = vector.broadcast %cst_4 : f32 to vector<2x128xf32>
    %8 = arith.divf %7, %6 : vector<2x128xf32>
    %c0_5 = arith.constant 0 : index
    %c0_6 = arith.constant 0 : index
    %c0_7 = arith.constant 0 : index
    %9 = vector.load %arg3[%c0_5, %c0_6, %c0_7] : memref<4x1x1xf32, #tpu.memory_space<vmem>>, vector<4x1x1xf32>
    %10 = vector.shape_cast %8 : vector<2x128xf32> to vector<1x2x128xf32>
    %11 = vector.broadcast %10 : vector<1x2x128xf32> to vector<4x2x128xf32>
    %12 = arith.mulf %1, %11 : vector<4x2x128xf32>
    %13 = vector.broadcast %9 : vector<4x1x1xf32> to vector<4x2x128xf32>
    %14 = arith.mulf %12, %13 : vector<4x2x128xf32>
    %c0_8 = arith.constant 0 : index
    %c0_9 = arith.constant 0 : index
    %c0_10 = arith.constant 0 : index
    %c0_11 = arith.constant 0 : index
    %15 = vector.load %arg4[%c0_8, %c0_9, %c0_10, %c0_11] : memref<1x4x2x128xf32, #tpu.memory_space<vmem>>, vector<1x4x2x128xf32>
    %16 = vector.shape_cast %15 : vector<1x4x2x128xf32> to vector<4x2x128xf32>
    %17 = vector.shape_cast %14 : vector<4x2x128xf32> to vector<1x4x2x128xf32>
    tpu.vector_store %arg4[%c0_8, %c0_9, %c0_10, %c0_11], %17 {strides = array<i32>} : memref<1x4x2x128xf32, #tpu.memory_space<vmem>>, vector<1x4x2x128xf32>,
    return
  }
  func.func @transform_0(%arg0: i32, %arg1: i32) -> (i32, i32, i32, i32) {
    %c0_i32 = arith.constant 0 : i32
    %c0_i32_0 = arith.constant 0 : i32
    %c0_i32_1 = arith.constant 0 : i32
    return %arg0, %c0_i32, %arg1, %c0_i32_0 : i32, i32, i32, i32
  }
  func.func @transform_1(%arg0: i32, %arg1: i32) -> (i32, i32, i32) {
    %c0_i32 = arith.constant 0 : i32
    %c0_i32_0 = arith.constant 0 : i32
    %c0_i32_1 = arith.constant 0 : i32
    %c0_i32_2 = arith.constant 0 : i32
    return %c0_i32, %c0_i32_0, %c0_i32_1 : i32, i32, i32
  }
  func.func @transform_2(%arg0: i32, %arg1: i32) -> (i32, i32, i32, i32) {
    %c0_i32 = arith.constant 0 : i32
    %c0_i32_0 = arith.constant 0 : i32
    %c0_i32_1 = arith.constant 0 : i32
    return %arg0, %c0_i32, %arg1, %c0_i32_0 : i32, i32, i32, i32
  }
}

</mosaic_0001>

<llo_original>
// kernel: tpu_custom_call.1
$region0: #{tpu_custom_call.1}
  #allocation0 [shape = 'u32[]', space=smem, size = 0x4, offset = 0x4, fixed_abs, tag = 'smem constant byte address 0x4 - core index']
  #allocation1 [shape = 'u32[72,128]{1,0:T(1,128)}', space=vmem, size = 0x9000, scoped, tag = 'internal scratch']
  %s0 = inlined_call_operand.hbm [shape: f32[2,4,2,128], index: 0, kind: input, shape index: {}]
  %s1 = inlined_call_operand.vmem [shape: f32[4,1,1], index: 1, kind: input, shape index: {}]
  %s2 = inlined_call_operand.hbm [shape: f32[2,4,2,128], index: 2, kind: output, shape index: {}]
  %s3 = sld [smem:[#allocation0]]
  $region45: #{tpu_custom_call.1} parent=0
    _
  %s5 = ssub.s32 1, %s3
  %s6 = scalar_select 0, %s5, %s3
  $region1: #{tpu_custom_call.1} parent=0
    #allocation2 [shape = 'u8[8192]{0}', space=vmem, size = 0x2000, scoped, tag = 'input window, operand 0']
    #allocation3 [shape = 's32[2]{0}', space=sflag, size = 0x8, scoped, tag = 'scoped memory for tpu_custom_call.1']
    #allocation4 [shape = 's32[2]{0}', space=sflag, size = 0x8, scoped, tag = 'scoped memory for tpu_custom_call.1']
    #allocation5 [shape = 'u8[8192]{0}', space=vmem, size = 0x2000, scoped, tag = 'output window, operand 0']
    %7 = vsyncpa [#allocation3], 0
    %s8 = scalar_lea.sflag [#allocation3], 1
    %9 = vsyncpa %s8, 0
    %10 = vsyncpa [#allocation4], 0
    %s11 = scalar_lea.sflag [#allocation4], 1
    %12 = vsyncpa %s11, 0
    loop: start=0, step=1, limit=4
    $region2: #{tpu_custom_call.1} parent=1 // loop_pre_header
      _
    $region3: #{tpu_custom_call.1} parent=1 // loop_header
      %s14 = sphi 0, %s18
      %p15 = scmp.ge.s32.totalorder %s14, 4
      %s21 = sphi 0, %s33
      %s22 = sphi 0, %s29
      %s23 = sphi 0, %s21
      %s24 = sphi 0, %s22
      %s25 = sphi 0, %s23
      %s26 = sphi 0, %s24
      %s38 = sphi 0, %s40
      %s41 = sphi 0, %s38
      %s42 = sphi 0, %s41
      %s58 = sphi 0, %s42
      %s62 = sphi 0, %s62
      %s64 = sphi 0, %s62
      %s65 = sphi 0, %s64
      %s79 = sphi 0, %s65
      %s87 = sphi 0, %s89
      %s90 = sphi 0, %s87
      %s91 = sphi 0, %s90
      %s107 = sphi 0, %s91
    $region4: #{tpu_custom_call.1} parent=1 // loop_header_branch
      %17 = sbr.rel (%p15) target = $region8
    $region5: #{tpu_custom_call.1} parent=1 // loop_body
      %s19 = ssub.s32 %s14, 1
      %s20 = ssub.s32 %s14, 2
      %s27 = sadd.s32 1, %s22
      %p28 = scmp.ge.s32.totalorder %s27, 1
      %s29 = scalar_select %p28, 0, %s27
      %s30 = sadd.s32 1, %s21
      %s31 = scalar_select %p28, %s30, %s21
      %p32 = scmp.ge.s32.totalorder %s31, 2
      %s33 = scalar_select %p32, 0, %s31
      %s34 = ssub.s32 %s21, %s33
      %s35 = ssub.s32 %s22, %s29
      %s36 = sor.u32 %s34, %s35
      %p37 = scmp.eq.s32.totalorder %s36, 0
      %s39 = sadd.s32 %s38, 1
      %s40 = scalar_select %p37, %s38, %s39
      %p43 = pneg %p37
      %p44 = scmp.eq.s32.totalorder %s14, 1
      %p45 = por %p43, %p44
      %p46 = scmp.ne.s32.totalorder %s38, %s41
      %p47 = scmp.eq.s32.totalorder %s14, 0
      %p48 = por %p46, %p47
      %p49 = scmp.ne.s32.totalorder %s38, %s41
      %p50 = scmp.eq.s32.totalorder %s19, 1
      %p51 = por %p49, %p50
      %p52 = scmp.ne.s32.totalorder %s41, %s42
      %p53 = scmp.eq.s32.totalorder %s19, 0
      %p54 = por %p52, %p53
      %p55 = scmp.ne.s32.totalorder %s41, %s42
      %p56 = scmp.eq.s32.totalorder %s20, 1
      %p57 = por %p55, %p56
      %p59 = scmp.ne.s32.totalorder %s42, %s58
      %p60 = scmp.eq.s32.totalorder %s20, 0
      %p61 = por %p59, %p60
      %s63 = sadd.s32 %s62, 1
      %p66 = scmp.eq.s32.totalorder %s14, 1
      %p67 = scmp.ne.s32.totalorder %s62, %s64
      %p68 = scmp.eq.s32.totalorder %s14, 0
      %p69 = por %p67, %p68
      %p70 = scmp.ne.s32.totalorder %s62, %s64
      %p71 = scmp.eq.s32.totalorder %s19, 1
      %p72 = por %p70, %p71
      %p73 = scmp.ne.s32.totalorder %s64, %s65
      %p74 = scmp.eq.s32.totalorder %s19, 0
      %p75 = por %p73, %p74
      %p76 = scmp.ne.s32.totalorder %s64, %s65
      %p77 = scmp.eq.s32.totalorder %s20, 1
      %p78 = por %p76, %p77
      %p80 = scmp.ne.s32.totalorder %s65, %s79
      %p81 = scmp.eq.s32.totalorder %s20, 0
      %p82 = por %p80, %p81
      %s83 = ssub.s32 %s21, %s33
      %s84 = ssub.s32 %s22, %s29
      %s85 = sor.u32 %s83, %s84
      %p86 = scmp.eq.s32.totalorder %s85, 0
      %s88 = sadd.s32 %s87, 1
      %s89 = scalar_select %p86, %s87, %s88
      %p92 = pneg %p86
      %p93 = scmp.eq.s32.totalorder %s14, 1
      %p94 = por %p92, %p93
      %p95 = scmp.ne.s32.totalorder %s87, %s90
      %p96 = scmp.eq.s32.totalorder %s14, 0
      %p97 = por %p95, %p96
      %p98 = scmp.ne.s32.totalorder %s87, %s90
      %p99 = scmp.eq.s32.totalorder %s19, 1
      %p100 = por %p98, %p99
      %p101 = scmp.ne.s32.totalorder %s90, %s91
      %p102 = scmp.eq.s32.totalorder %s19, 0
      %p103 = por %p101, %p102
      %p104 = scmp.ne.s32.totalorder %s90, %s91
      %p105 = scmp.eq.s32.totalorder %s20, 1
      %p106 = por %p104, %p105
      %p108 = scmp.ne.s32.totalorder %s91, %s107
      %p109 = scmp.eq.s32.totalorder %s20, 0
      %p110 = por %p108, %p109
      %p111 = scmp.le.s32.totalorder 1, %s14
      %p112 = scmp.lt.s32.totalorder %s14, 3
      %p113 = pnand %p111, %p112
      %p114 = pneg %p113
      // Predicated region
      $region9: #{tpu_custom_call.1} parent=5 // pred_check
        _
      $region10: #{tpu_custom_call.1} parent=5 // pred_check_branch
        %116 = sbr.rel (%p113) target = $region12
      $region11: #{tpu_custom_call.1} parent=5 // pred_region
        %s117 = ssub.s32 %s14, 1
        // Predicated region
        $region13: #{tpu_custom_call.1} parent=11 // pred_check
          %p118 = pneg %p75
        $region14: #{tpu_custom_call.1} parent=11 // pred_check_branch
          %120 = sbr.rel (%p118) target = $region16
        $region15: #{tpu_custom_call.1} parent=11 // pred_region
          _
        $region16: #{tpu_custom_call.1} parent=11 // pred_fallthru
          _
      $region12: #{tpu_custom_call.1} parent=5 // pred_fallthru
        _
      %p121 = scmp.lt.s32.totalorder %s14, 2
      // Predicated region
      $region17: #{tpu_custom_call.1} parent=5 // pred_check
        %p122 = pneg %p121
      $region18: #{tpu_custom_call.1} parent=5 // pred_check_branch
        %124 = sbr.rel (%p122) target = $region20
      $region19: #{tpu_custom_call.1} parent=5 // pred_region
        // Predicated region
        $region21: #{tpu_custom_call.1} parent=19 // pred_check
          %p125 = pneg %p48
        $region22: #{tpu_custom_call.1} parent=19 // pred_check_branch
          %127 = sbr.rel (%p125) target = $region24
        $region23: #{tpu_custom_call.1} parent=19 // pred_region
          %s128 = sand.u32 %s38, 1
          %s129 = scalar_lea.sflag [#allocation3], %s128
          %s130 = sand.u32 %s38, 1
          %s131 = smul.addr %s130, 8
          %s132 = scalar_lea.vmem [#allocation2], %s131
          %134 = vsyncadd %s129, 0
          %s135 = smul.addr %s21, 4
          %s136 = sadd.s32 %s22, %s135
          %s137 = smul.addr %s136, 2
          %s138 = scalar_lea.hbm %s0, %s137
          %s139 = sshll.u32 %s138, 4
          %s140 = int_to_ptr.hbm [resolvable:$true] %s139
          %s141 = sshll.u32 %s132, 4
          %s142 = int_to_ptr.vmem [resolvable:$true] %s141
          %147 = dma.hbm_to_vmem [thread:$0]  %s140, 128, %s142, %s129, 32, 32, 2
        $region24: #{tpu_custom_call.1} parent=19 // pred_fallthru
          _
      $region20: #{tpu_custom_call.1} parent=5 // pred_fallthru
        _
      %p148 = scmp.le.s32.totalorder 1, %s14
      %p149 = scmp.lt.s32.totalorder %s14, 3
      %p150 = pnand %p148, %p149
      %p151 = pneg %p150
      // Predicated region
      $region25: #{tpu_custom_call.1} parent=5 // pred_check
        _
      $region26: #{tpu_custom_call.1} parent=5 // pred_check_branch
        %153 = sbr.rel (%p150) target = $region28
      $region27: #{tpu_custom_call.1} parent=5 // pred_region
        %s154 = ssub.s32 %s14, 1
        %s155 = sand.u32 %s41, 1
        %s156 = scalar_lea.sflag [#allocation3], %s155
        %s157 = sand.u32 %s41, 1
        %s158 = smul.addr %s157, 8
        %s159 = scalar_lea.vmem [#allocation2], %s158
        // Predicated region
        $region29: #{tpu_custom_call.1} parent=27 // pred_check
          %p160 = pneg %p54
        $region30: #{tpu_custom_call.1} parent=27 // pred_check_branch
          %162 = sbr.rel (%p160) target = $region32
        $region31: #{tpu_custom_call.1} parent=27 // pred_region
          %164 = dma.done %s156, 128
        $region32: #{tpu_custom_call.1} parent=27 // pred_fallthru
          _
        %s165 = sand.u32 %s41, 1
        %s166 = scalar_lea.sflag [#allocation3], %s165
        %s167 = sand.u32 %s41, 1
        %s168 = smul.addr %s167, 8
        %s169 = scalar_lea.vmem [#allocation2], %s168
        %p170 = pneg %p54
        %p171 = pneg %p51
        %p172 = pneg %p75
        %p173 = pneg %p72
        %p174 = pneg %p103
        %p175 = pneg %p100
        %s176 = sand.u32 %s90, 1
        %s177 = scalar_lea.sflag [#allocation4], %s176
        %s178 = sand.u32 %s90, 1
        %s179 = smul.addr %s178, 8
        %s180 = scalar_lea.vmem [#allocation5], %s179
        %v181 = vld [vmem:[%s159] sm:$0x3]
        %v182 = vld [vmem:[%s159 + $0x2] sm:$0x3]
        %v183 = vld [vmem:[%s159 + $0x4] sm:$0x3]
        %v184 = vld [vmem:[%s159 + $0x6] sm:$0x3]
        %v185 = vmul.f32 %v181, %v181
        %v186 = vmul.f32 %v182, %v182
        %v187 = vmul.f32 %v183, %v183
        %v188 = vmul.f32 %v184, %v184
        %vm189 = vcmask 1041408
        %v190 = vsel %vm189, %v185, 0.0
        %v191 = vsel %vm189, %v186, 0.0
        %v192 = vadd.f32 %v190, %v191
        %v193 = vsel %vm189, %v187, 0.0
        %v194 = vadd.f32 %v192, %v193
        %v195 = vsel %vm189, %v188, 0.0
        %v196 = vadd.f32 %v194, %v195
        %v197 = vrsqrt.pop %v196
        %v198 = vmul.f32 %v197, %v196
        %v199 = vmul.f32 %v198, %v197
        %v200 = vmul.f32 0.5, %v199
        %v201 = vsub.f32 1.5, %v200
        %v202 = vmul.f32 %v197, %v201
        %v203 = vmul.f32 %v196, %v202
        %vm204 = vcmp.eq.f32.partialorder %v196, inf
        %v205 = vsel %vm204, %v196, %v203
        %vm206 = vcmp.eq.f32.partialorder %v196, 0.0
        %v207 = vand.u32 %v196, 2147483648
        %v208 = vsel %vm206, %v207, %v205
        %v209 = vadd.f32 %v208, 1e-10
        %v210 = vrcp.pop %v209
        %v211 = vmul.f32 %v209, %v210
        %v212 = vsub.f32 1.0, %v211
        %v213 = vmul.f32 %v210, %v212
        %v214 = vadd.f32 %v210, %v213
        %vm215 = vweird.f32 %v209
        %vm216 = vweird.f32 %v210
        %vm217 = vmor %vm215, %vm216
        %v218 = vsel %vm217, %v210, %v214
        %v219 = vand.u32 2147483647, %v209
        %vm220 = vcmp.eq.f32.partialorder %v219, 8.507059e+37
        %v221 = vand.u32 %v209, 2147483648
        %v222 = vor.u32 1.1754944e-38, %v221
        %v223 = vsel %vm220, %v222, %v218
        %v224 = vmul.f32 1.0, %v223
        %v225 = vld [vmem:[%s1] sm:$0x1]
        %v226 = vld [vmem:[%s1 + $0x1] sm:$0x1]
        %v227 = vld [vmem:[%s1 + $0x2] sm:$0x1]
        %v228 = vld [vmem:[%s1 + $0x3] sm:$0x1]
        %v229 = vmul.f32 %v181, %v224
        %v230 = vmul.f32 %v182, %v224
        %v231 = vmul.f32 %v183, %v224
        %v232 = vmul.f32 %v184, %v224
        %v237 = vperm.slane %v225, 0
        %v238 = vperm.slane %v226, 0
        %v239 = vperm.slane %v227, 0
        %v240 = vperm.slane %v228, 0
        %241 = vset.pattern.permute.xlu0 0
        %242 = vperm.xlu0 %241, %v237
        %v243 = vpop.permute.xlu0 %242
        %245 = vset.pattern.permute.xlu0 0
        %246 = vperm.xlu0 %245, %v238
        %v247 = vpop.permute.xlu0 %246
        %249 = vset.pattern.permute.xlu0 0
        %250 = vperm.xlu0 %249, %v239
        %v251 = vpop.permute.xlu0 %250
        %253 = vset.pattern.permute.xlu0 0
        %254 = vperm.xlu0 %253, %v240
        %v255 = vpop.permute.xlu0 %254
        %v257 = vmul.f32 %v229, %v243
        %v258 = vmul.f32 %v230, %v247
        %v259 = vmul.f32 %v231, %v251
        %v260 = vmul.f32 %v232, %v255
        %261 = vst [vmem:[%s180] sm:$0x3] %v257
        %262 = vst [vmem:[%s180 + $0x2] sm:$0x3] %v258
        %263 = vst [vmem:[%s180 + $0x4] sm:$0x3] %v259
        %264 = vst [vmem:[%s180 + $0x6] sm:$0x3] %v260
        %s265 = sand.u32 %s90, 1
        %s266 = scalar_lea.sflag [#allocation4], %s265
        %s267 = sand.u32 %s90, 1
        %s268 = smul.addr %s267, 8
        %s269 = scalar_lea.vmem [#allocation5], %s268
        // Predicated region
        $region33: #{tpu_custom_call.1} parent=27 // pred_check
          %p270 = pneg %p100
        $region34: #{tpu_custom_call.1} parent=27 // pred_check_branch
          %272 = sbr.rel (%p270) target = $region36
        $region35: #{tpu_custom_call.1} parent=27 // pred_region
          %274 = vsyncadd %s266, 0
          %s275 = smul.addr %s23, 4
          %s276 = sadd.s32 %s24, %s275
          %s277 = smul.addr %s276, 2
          %s278 = scalar_lea.hbm %s2, %s277
          %s279 = sshll.u32 %s269, 4
          %s280 = int_to_ptr.vmem [resolvable:$true] %s279
          %s281 = sshll.u32 %s278, 4
          %s282 = int_to_ptr.hbm [resolvable:$true] %s281
          %287 = dma.vmem_to_hbm [thread:$0]  %s280, 128, %s282, %s266, 32, 32, 2
        $region36: #{tpu_custom_call.1} parent=27 // pred_fallthru
          _
      $region28: #{tpu_custom_call.1} parent=5 // pred_fallthru
        _
      %p288 = scmp.le.s32.totalorder 2, %s14
      // Predicated region
      $region37: #{tpu_custom_call.1} parent=5 // pred_check
        %p289 = pneg %p288
      $region38: #{tpu_custom_call.1} parent=5 // pred_check_branch
        %291 = sbr.rel (%p289) target = $region40
      $region39: #{tpu_custom_call.1} parent=5 // pred_region
        %s292 = ssub.s32 %s14, 2
        // Predicated region
        $region41: #{tpu_custom_call.1} parent=39 // pred_check
          %p293 = pneg %p106
        $region42: #{tpu_custom_call.1} parent=39 // pred_check_branch
          %295 = sbr.rel (%p293) target = $region44
        $region43: #{tpu_custom_call.1} parent=39 // pred_region
          %s296 = sand.u32 %s91, 1
          %s297 = scalar_lea.sflag [#allocation4], %s296
          %s298 = sand.u32 %s91, 1
          %s299 = smul.addr %s298, 8
          %s300 = scalar_lea.vmem [#allocation5], %s299
          %302 = dma.done %s297, 128
        $region44: #{tpu_custom_call.1} parent=39 // pred_fallthru
          _
      $region40: #{tpu_custom_call.1} parent=5 // pred_fallthru
        _
    $region6: #{tpu_custom_call.1} parent=1 // loop_footer
      %s18 = sadd.s32 1, %s14
    $region7: #{tpu_custom_call.1} parent=1 // loop_footer_branch
      %13 = sbr.rel target = $region3
    $region8: #{tpu_custom_call.1} parent=1 // loop_exit
      _
    %303 = vsyncpa [#allocation3], 1
    %s304 = scalar_lea.sflag [#allocation3], 1
    %305 = vsyncpa %s304, 1
    %306 = vsyncpa [#allocation4], 1
    %s307 = scalar_lea.sflag [#allocation4], 1
    %308 = vsyncpa %s307, 1

</llo_original>
